<compile_context>
chip_gen: v5e
topology: v5e:2x2
jax: 0.10.0
libtpu: 0.0.40
codegen_flags: <defaults>
</compile_context>

<pallas_src>
import jax
import jax.numpy as jnp
from jax.experimental import pallas as pl
from jax.experimental.pallas import tpu as pltpu


# ---------------------------------------------------------------------------
# Pallas kernel: im2col-matmul + bias (the conv compute)
# ---------------------------------------------------------------------------
def _conv_matmul_kernel(a_ref, b_ref, bias_ref, o_ref):
    # a_ref:    (TM, K)  bf16 im2col patch tile (streamed)
    # b_ref:    (K, OC)  bf16 reshaped conv weights (resident across the grid)
    # bias_ref: (1, OC)  f32 conv bias (resident)
    # o_ref:    (TM, OC) bf16 output tile (f32 accumulate, bf16 store)
    acc = jnp.dot(a_ref[...], b_ref[...], preferred_element_type=jnp.float32)
    o_ref[...] = (acc + bias_ref[...]).astype(o_ref.dtype)


def _round_up(x, m):
    return ((x + m - 1) // m) * m


def _is_multi_tensorcore():
    """True only for parts with >=2 TensorCores per chip (v7x-class)."""
    try:
        kind = jax.devices()[0].device_kind.lower()
        return ("v7" in kind) or ("7x" in kind)
    except Exception:
        return False


def _choose_tm(M, tm_max=4096):
    """Largest multiple-of-8 divisor of M that is <= tm_max (no padding, no
    partial tiles).  Falls back to a padded tile if M is not a multiple of 8.
    On multi-TensorCore parts (v7x) keep >=2 grid steps so the "parallel"
    grid axis can be sharded across cores; on 1-TC chips (v5e/v6e) the extra
    step is pure overhead, so don't split."""
    if M % 8 == 0:
        upper = min(tm_max, M)
        upper -= upper % 8
        tm = None
        for d in range(upper, 7, -8):
            if M % d == 0:
                tm = d
                break
        if tm is not None:
            if _is_multi_tensorcore() and (M // tm) < 2 and M % 16 == 0:
                tm = M // 2
            return tm, False
    # ragged-M fallback: pad A up to a multiple of tm (rarely hit: odd H/W).
    return max(8, min(tm_max, _round_up(M, 8))), True


def _conv_matmul(a, b, bias, *, tm_max=4096, out_dtype=jnp.bfloat16):
    M, K = a.shape
    _, OC = b.shape
    tm, needs_pad = _choose_tm(M, tm_max)
    M_pad = _round_up(M, tm) if needs_pad else M
    if M_pad != M:
        a = jnp.pad(a, ((0, M_pad - M), (0, 0)))
    bias2d = bias.reshape(1, OC).astype(jnp.float32)

    itemsize = jnp.dtype(out_dtype).itemsize
    cost = pl.CostEstimate(
        flops=2 * M_pad * K * OC,
        transcendentals=0,
        bytes_accessed=(M_pad * K * a.dtype.itemsize      # A read
                        + K * OC * b.dtype.itemsize        # weights
                        + OC * 4                           # bias
                        + M_pad * OC * itemsize),          # output write
    )

    out = pl.pallas_call(
        _conv_matmul_kernel,
        out_shape=jax.ShapeDtypeStruct((M_pad, OC), out_dtype),
        grid_spec=pltpu.PrefetchScalarGridSpec(
            num_scalar_prefetch=0,
            grid=(M_pad // tm,),
            in_specs=[
                pl.BlockSpec((tm, K), lambda i: (i, 0)),   # streaming A tiles
                pl.BlockSpec((K, OC), lambda i: (0, 0)),   # weights stay in VMEM
                pl.BlockSpec((1, OC), lambda i: (0, 0)),   # bias stays in VMEM
            ],
            out_specs=pl.BlockSpec((tm, OC), lambda i: (i, 0)),
        ),
        compiler_params=pltpu.CompilerParams(
            dimension_semantics=("parallel",),
            vmem_limit_bytes=32 * 1024 * 1024,
        ),
        cost_estimate=cost,
    )(a, b, bias2d)
    return out if M_pad == M else out[:M]


# ---------------------------------------------------------------------------
# YOLO forward: Conv2d(3 -> 192, kernel=7, stride=2, padding=3)
# ---------------------------------------------------------------------------
def yolo_forward(x, w, bias, *, x_layout="NCHW", out_layout="NHWC",
                 out_dtype=jnp.bfloat16, tm_max=4096):
    """x: (N, 3, H, W) [or (N, H, W, 3) if x_layout='NHWC'].
    w: (192, 3, 7, 7) f32.  bias: (192,) f32.
    Returns NHWC bf16 by default (the TPU-native layout the next layer should
    consume); NCHW is available but costs a full extra HBM pass."""
    OC, C, KH, KW = w.shape
    stride, pad = 2, 3

    if x_layout == "NCHW":
        N, _, H, W = x.shape
        # Cheap one-time NHWC + bf16 conversion of the *raw* input (tiny vs.
        # the expanded im2col tensor).  Pass x_layout="NHWC" to skip it.
        x = x.transpose(0, 2, 3, 1)
    else:
        N, H, W, _ = x.shape
    x = x.astype(jnp.bfloat16)

    OH = (H + 2 * pad - KH) // stride + 1
    OW = (W + 2 * pad - KW) // stride + 1

    x = jnp.pad(x, ((0, 0), (pad, pad), (pad, pad), (0, 0)))

    # im2col built directly in final (kh, kw, c)-major layout: concatenate the
    # 49 strided slices along the trailing (lane) axis -> no expanded-tensor
    # transpose.  (Materializing A in HBM is the remaining gap; see TODO.)
    cols = []
    for kh in range(KH):
        for kw in range(KW):
            cols.append(
                x[:, kh:kh + stride * OH:stride, kw:kw + stride * OW:stride, :]
            )  # (N, OH, OW, C)
    a = jnp.concatenate(cols, axis=-1).reshape(N * OH * OW, KH * KW * C)

    # Weights reordered to match the (kh, kw, c) flattening, cast to bf16.
    b = w.transpose(2, 3, 1, 0).reshape(KH * KW * C, OC).astype(jnp.bfloat16)

    out = _conv_matmul(a, b, bias, tm_max=tm_max, out_dtype=out_dtype)
    out = out.reshape(N, OH, OW, OC)          # free reshape (major dims only)
    if out_layout == "NHWC":
        return out                            # default: TPU-native layout
    return out.transpose(0, 3, 1, 2)          # NCHW (extra HBM pass) on request


if __name__ == "__main__":
    key = jax.random.PRNGKey(0)
    kx, kw_, kb = jax.random.split(key, 3)

    # small shapes consistent with the module: batch=2, in_channels=3, 16x16
    N, C, H, W = 2, 3, 16, 16
    OC, KH, KW = 192, 7, 7

    x = jax.random.normal(kx, (N, C, H, W), dtype=jnp.float32)
    fan_in = C * KH * KW
    w = jax.random.normal(kw_, (OC, C, KH, KW), dtype=jnp.float32) * (1.0 / fan_in) ** 0.5
    bias = jax.random.normal(kb, (OC,), dtype=jnp.float32) * 0.01

    fwd = jax.jit(yolo_forward)
    out = jax.block_until_ready(fwd(x, w, bias))
    assert out.shape == (N, H // 2, W // 2, OC), out.shape
    assert out.dtype == jnp.bfloat16, out.dtype

    # reference check vs XLA conv (same semantics as torch Conv2d); tolerance
    # loosened for bf16 operands/output (f32 accumulation keeps error ~1e-2).
    ref = jax.lax.conv_general_dilated(
        x, w, window_strides=(2, 2), padding=((3, 3), (3, 3)),
        dimension_numbers=("NCHW", "OIHW", "NCHW"),
    ) + bias.reshape(1, OC, 1, 1)
    ref_nhwc = jnp.transpose(ref, (0, 2, 3, 1))
    out_f32 = out.astype(jnp.float32)
    max_err = float(jnp.max(jnp.abs(out_f32 - ref_nhwc)))
    assert jnp.allclose(out_f32, ref_nhwc, atol=8e-2, rtol=5e-2), max_err

    print("KERNEL_OK")
</pallas_src>

<mosaic_0001>
module attributes {stable_mosaic.version = 11 : i64} {
  func.func @_conv_matmul_kernel(%arg0: i32, %arg1: memref<128x147xbf16, #tpu.memory_space<vmem>>, %arg2: memref<147x192xbf16, #tpu.memory_space<vmem>>, %arg3: memref<1x192xf32, #tpu.memory_space<vmem>>, %arg4: memref<128x192xbf16, #tpu.memory_space<vmem>>) attributes {dimension_semantics = [#tpu.dimension_semantics<parallel>], iteration_bounds = array<i64: 1>, scalar_prefetch = 0 : i64, scratch_operands = 0 : i64, tpu.core_type = #tpu.core_type<tc>, window_params = [{transform_indices = @transform_0, window_bounds = array<i64: 128, 147>}, {pipeline_mode = #tpu.pipeline_mode<synchronous>, transform_indices = @transform_1, window_bounds = array<i64: 147, 192>}, {pipeline_mode = #tpu.pipeline_mode<synchronous>, transform_indices = @transform_2, window_bounds = array<i64: 1, 192>}, {transform_indices = @transform_3, window_bounds = array<i64: 128, 192>}]} {
    %c0 = arith.constant 0 : index
    %c0_0 = arith.constant 0 : index
    %0 = vector.load %arg1[%c0, %c0_0] : memref<128x147xbf16, #tpu.memory_space<vmem>>, vector<128x147xbf16>
    %c0_1 = arith.constant 0 : index
    %c0_2 = arith.constant 0 : index
    %1 = vector.load %arg2[%c0_1, %c0_2] : memref<147x192xbf16, #tpu.memory_space<vmem>>, vector<147x192xbf16>
    %cst = arith.constant dense<0.000000e+00> : vector<128x192xf32>
    %2 = tpu.matmul %0, %1, %cst {dimension_numbers = #tpu.dot_dimension_numbers<[1], [0], [0], [1], [0, 0, 1, 1], [], []>} : vector<128x147xbf16>, vector<147x192xbf16>, vector<128x192xf32> -> vector<128x192xf32>
    %c0_3 = arith.constant 0 : index
    %c0_4 = arith.constant 0 : index
    %3 = vector.load %arg3[%c0_3, %c0_4] : memref<1x192xf32, #tpu.memory_space<vmem>>, vector<1x192xf32>
    %4 = vector.broadcast %3 : vector<1x192xf32> to vector<128x192xf32>
    %5 = arith.addf %2, %4 : vector<128x192xf32>
    %6 = arith.truncf %5 : vector<128x192xf32> to vector<128x192xbf16>
    %c0_5 = arith.constant 0 : index
    %c0_6 = arith.constant 0 : index
    %7 = vector.load %arg4[%c0_5, %c0_6] : memref<128x192xbf16, #tpu.memory_space<vmem>>, vector<128x192xbf16>
    tpu.vector_store %arg4[%c0_5, %c0_6], %6 {strides = array<i32>} : memref<128x192xbf16, #tpu.memory_space<vmem>>, vector<128x192xbf16>,
    return
  }
  func.func @transform_0(%arg0: i32) -> (i32, i32) {
    %c0_i32 = arith.constant 0 : i32
    %c0_i32_0 = arith.constant 0 : i32
    return %arg0, %c0_i32 : i32, i32
  }
  func.func @transform_1(%arg0: i32) -> (i32, i32) {
    %c0_i32 = arith.constant 0 : i32
    %c0_i32_0 = arith.constant 0 : i32
    %c0_i32_1 = arith.constant 0 : i32
    return %c0_i32, %c0_i32_0 : i32, i32
  }
  func.func @transform_2(%arg0: i32) -> (i32, i32) {
    %c0_i32 = arith.constant 0 : i32
    %c0_i32_0 = arith.constant 0 : i32
    %c0_i32_1 = arith.constant 0 : i32
    return %c0_i32, %c0_i32_0 : i32, i32
  }
  func.func @transform_3(%arg0: i32) -> (i32, i32) {
    %c0_i32 = arith.constant 0 : i32
    %c0_i32_0 = arith.constant 0 : i32
    return %arg0, %c0_i32 : i32, i32
  }
}

</mosaic_0001>

<llo_original>
// kernel: yolo_forward.1
$region0: #{yolo_forward.1}
  #allocation0 [shape = 'u32[]', space=smem, size = 0x4, offset = 0x4, fixed_abs, tag = 'smem constant byte address 0x4 - core index']
  #allocation1 [shape = 'u32[72,128]{1,0:T(1,128)}', space=vmem, size = 0x9000, scoped, tag = 'internal scratch']
  %s0 = inlined_call_operand.vmem [shape: bf16[128,147], index: 0, kind: input, shape index: {}]
  %s1 = inlined_call_operand.vmem [shape: bf16[147,192], index: 1, kind: input, shape index: {}]
  %s2 = inlined_call_operand.vmem [shape: f32[1,192], index: 2, kind: input, shape index: {}]
  %s3 = inlined_call_operand.hbm [shape: bf16[128,192], index: 3, kind: output, shape index: {}]
  %s4 = sld [smem:[#allocation0]]
  $region22: #{yolo_forward.1} parent=0
    _
  %s6 = ssub.s32 1, %s4
  %s7 = scalar_select 0, %s6, %s4
  $region1: #{yolo_forward.1} parent=0
    #allocation2 [shape = 'u8[65536]{0}', space=vmem, size = 0x10000, scoped, tag = 'output window, operand 0, single buffered']
    #allocation3 [shape = 's32[1]{0}', space=sflag, size = 0x4, scoped, tag = 'scoped memory for yolo_forward.1']
    %8 = vsyncpa [#allocation3], 0
    // Predicated region
    $region2: #{yolo_forward.1} parent=1 // pred_check
      _
    $region3: #{yolo_forward.1} parent=1 // pred_check_branch
      %10 = sbr.rel (0) target = $region5
    $region4: #{yolo_forward.1} parent=1 // pred_region
      _
    $region5: #{yolo_forward.1} parent=1 // pred_fallthru
      _
    // Predicated region
    $region6: #{yolo_forward.1} parent=1 // pred_check
      _
    $region7: #{yolo_forward.1} parent=1 // pred_check_branch
      %12 = sbr.rel (0) target = $region9
    $region8: #{yolo_forward.1} parent=1 // pred_region
      _
    $region9: #{yolo_forward.1} parent=1 // pred_fallthru
      _
    // Predicated region
    $region10: #{yolo_forward.1} parent=1 // pred_check
      _
    $region11: #{yolo_forward.1} parent=1 // pred_check_branch
      %14 = sbr.rel (0) target = $region13
    $region12: #{yolo_forward.1} parent=1 // pred_region
      _
    $region13: #{yolo_forward.1} parent=1 // pred_fallthru
      _
    %v16 = vld [vmem:[%s0] sm:$0xff]
    %v17 = vld [vmem:[%s0 + $0x8] sm:$0xff]
    %v18 = vld [vmem:[%s0 + $0x10] sm:$0xff]
    %v19 = vld [vmem:[%s0 + $0x18] sm:$0xff]
    %v20 = vld [vmem:[%s0 + $0x20] sm:$0xff]
    %v21 = vld [vmem:[%s0 + $0x28] sm:$0xff]
    %v22 = vld [vmem:[%s0 + $0x30] sm:$0xff]
    %v23 = vld [vmem:[%s0 + $0x38] sm:$0xff]
    %v24 = vld [vmem:[%s0 + $0x40] sm:$0xff]
    %v25 = vld [vmem:[%s0 + $0x48] sm:$0xff]
    %v26 = vld [vmem:[%s0 + $0x50] sm:$0xff]
    %v27 = vld [vmem:[%s0 + $0x58] sm:$0xff]
    %v28 = vld [vmem:[%s0 + $0x60] sm:$0xff]
    %v29 = vld [vmem:[%s0 + $0x68] sm:$0xff]
    %v30 = vld [vmem:[%s0 + $0x70] sm:$0xff]
    %v31 = vld [vmem:[%s0 + $0x78] sm:$0xff]
    %v32 = vld [vmem:[%s1] sm:$0xff]
    %v33 = vld [vmem:[%s1 + $0x8] sm:$0xff]
    %v34 = vld [vmem:[%s1 + $0x10] sm:$0xff]
    %v35 = vld [vmem:[%s1 + $0x18] sm:$0xff]
    %v36 = vld [vmem:[%s1 + $0x20] sm:$0xff]
    %v37 = vld [vmem:[%s1 + $0x28] sm:$0xff]
    %v38 = vld [vmem:[%s1 + $0x30] sm:$0xff]
    %v39 = vld [vmem:[%s1 + $0x38] sm:$0xff]
    %v40 = vld [vmem:[%s1 + $0x40] sm:$0xff]
    %v41 = vld [vmem:[%s1 + $0x48] sm:$0xff]
    %v42 = vld [vmem:[%s1 + $0x50] sm:$0xff]
    %v43 = vld [vmem:[%s1 + $0x58] sm:$0xff]
    %v44 = vld [vmem:[%s1 + $0x60] sm:$0xff]
    %v45 = vld [vmem:[%s1 + $0x68] sm:$0xff]
    %v46 = vld [vmem:[%s1 + $0x70] sm:$0xff]
    %v47 = vld [vmem:[%s1 + $0x78] sm:$0xff]
    %v48 = vld [vmem:[%s1 + $0x80] sm:$0xff]
    %v49 = vld [vmem:[%s1 + $0x88] sm:$0xff]
    %v50 = vld [vmem:[%s1 + $0x90] sm:$0x33]
    %v51 = vld [vmem:[%s2] sm:$0x3]
    %v53 = vperm.slane %v51, 0
    %v54 = vperm.slane %v51, 1
    %v73 = vunpack.c.l.b16 %v16
    %v74 = vunpack.c.h.b16 %v16
    %v75 = vunpack.c.l.b16 %v17
    %v76 = vunpack.c.h.b16 %v17
    %v77 = vunpack.c.l.b16 %v18
    %v78 = vunpack.c.h.b16 %v18
    %v79 = vunpack.c.l.b16 %v19
    %v80 = vunpack.c.h.b16 %v19
    %v81 = vunpack.c.l.b16 %v20
    %v82 = vunpack.c.h.b16 %v20
    %v83 = vunpack.c.l.b16 %v21
    %v84 = vunpack.c.h.b16 %v21
    %v85 = vunpack.c.l.b16 %v22
    %v86 = vunpack.c.h.b16 %v22
    %v87 = vunpack.c.l.b16 %v23
    %v88 = vunpack.c.h.b16 %v23
    %v89 = vunpack.c.l.b16 %v24
    %v90 = vunpack.c.h.b16 %v24
    %v91 = vunpack.c.l.b16 %v25
    %v92 = vunpack.c.h.b16 %v25
    %v93 = vunpack.c.l.b16 %v26
    %v94 = vunpack.c.h.b16 %v26
    %v95 = vunpack.c.l.b16 %v27
    %v96 = vunpack.c.h.b16 %v27
    %v97 = vunpack.c.l.b16 %v28
    %v98 = vunpack.c.h.b16 %v28
    %v99 = vunpack.c.l.b16 %v29
    %v100 = vunpack.c.h.b16 %v29
    %v101 = vunpack.c.l.b16 %v30
    %v102 = vunpack.c.h.b16 %v30
    %v103 = vunpack.c.l.b16 %v31
    %v104 = vunpack.c.h.b16 %v31
    %v105 = vpack.c.b16 %v75, %v73
    %v106 = vpack.c.b16 %v76, %v74
    %v107 = vpack.c.b16 %v79, %v77
    %v108 = vpack.c.b16 %v80, %v78
    %v109 = vpack.c.b16 %v83, %v81
    %v110 = vpack.c.b16 %v84, %v82
    %v111 = vpack.c.b16 %v87, %v85
    %v112 = vpack.c.b16 %v88, %v86
    %v113 = vpack.c.b16 %v91, %v89
    %v114 = vpack.c.b16 %v92, %v90
    %v115 = vpack.c.b16 %v95, %v93
    %v116 = vpack.c.b16 %v96, %v94
    %v117 = vpack.c.b16 %v99, %v97
    %v118 = vpack.c.b16 %v100, %v98
    %v119 = vpack.c.b16 %v103, %v101
    %v120 = vpack.c.b16 %v104, %v102
    %v148 = vunpack.c.l.b16 %v32
    %v149 = vunpack.c.h.b16 %v32
    %v150 = vunpack.c.l.b16 %v33
    %v151 = vunpack.c.h.b16 %v33
    %v152 = vunpack.c.l.b16 %v34
    %v153 = vunpack.c.h.b16 %v34
    %v154 = vunpack.c.l.b16 %v35
    %v155 = vunpack.c.h.b16 %v35
    %v156 = vunpack.c.l.b16 %v36
    %v157 = vunpack.c.h.b16 %v36
    %v158 = vunpack.c.l.b16 %v37
    %v159 = vunpack.c.h.b16 %v37
    %v160 = vunpack.c.l.b16 %v38
    %v161 = vunpack.c.h.b16 %v38
    %v162 = vunpack.c.l.b16 %v39
    %v163 = vunpack.c.h.b16 %v39
    %v164 = vunpack.c.l.b16 %v40
    %v165 = vunpack.c.h.b16 %v40
    %v166 = vunpack.c.l.b16 %v41
    %v167 = vunpack.c.h.b16 %v41
    %v168 = vunpack.c.l.b16 %v42
    %v169 = vunpack.c.h.b16 %v42
    %v170 = vunpack.c.l.b16 %v43
    %v171 = vunpack.c.h.b16 %v43
    %v172 = vunpack.c.l.b16 %v44
    %v173 = vunpack.c.h.b16 %v44
    %v174 = vunpack.c.l.b16 %v45
    %v175 = vunpack.c.h.b16 %v45
    %v176 = vunpack.c.l.b16 %v46
    %v177 = vunpack.c.h.b16 %v46
    %v178 = vunpack.c.l.b16 %v47
    %v179 = vunpack.c.h.b16 %v47
    %v180 = vunpack.c.l.b16 %v48
    %v181 = vunpack.c.h.b16 %v48
    %v182 = vunpack.c.l.b16 %v49
    %v183 = vunpack.c.h.b16 %v49
    %v184 = vunpack.c.l.b16 %v50
    %v185 = vunpack.c.h.b16 %v50
    %v186 = vpack.c.b16 %v150, %v148
    %v187 = vpack.c.b16 %v151, %v149
    %v188 = vpack.c.b16 %v154, %v152
    %v189 = vpack.c.b16 %v155, %v153
    %v190 = vpack.c.b16 %v158, %v156
    %v191 = vpack.c.b16 %v159, %v157
    %v192 = vpack.c.b16 %v162, %v160
    %v193 = vpack.c.b16 %v163, %v161
    %v194 = vpack.c.b16 %v166, %v164
    %v195 = vpack.c.b16 %v167, %v165
    %v196 = vpack.c.b16 %v170, %v168
    %v197 = vpack.c.b16 %v171, %v169
    %v198 = vpack.c.b16 %v174, %v172
    %v199 = vpack.c.b16 %v175, %v173
    %v200 = vpack.c.b16 %v178, %v176
    %v201 = vpack.c.b16 %v179, %v177
    %v202 = vpack.c.b16 %v182, %v180
    %v203 = vpack.c.b16 %v183, %v181
    %v204 = vpack.c.b16 %v184, %v184
    %v205 = vpack.c.b16 %v185, %v185
    %vm224 = vcmask 154624
    %v226 = vsel %vm224, %v106, 0
    %v229 = vsel %vm224, %v108, 0
    %v232 = vsel %vm224, %v110, 0
    %v235 = vsel %vm224, %v112, 0
    %v238 = vsel %vm224, %v114, 0
    %v241 = vsel %vm224, %v116, 0
    %v244 = vsel %vm224, %v118, 0
    %v247 = vsel %vm224, %v120, 0
    %vm249 = vcmask 1040384
    %vm250 = vcmask 1041408
    %v251 = vsel %vm249, 4294967295, 65535
    %v252 = vsel %vm250, %v251, 0
    %v254 = vand.u32 %v204, %v252
    %v257 = vand.u32 %v205, %v252
    %259 = vmatpush.bf16.msra.mxu0 %v200
    %260 = vmatpush.bf16.msra.mxu0 %v198
    %261 = vmatpush.bf16.msra.mxu0 %v196
    %262 = vmatpush.bf16.msra.mxu0 %v194
    %263 = vmatpush.bf16.msra.mxu0 %v192
    %264 = vmatpush.bf16.msra.mxu0 %v190
    %265 = vmatpush.bf16.msra.mxu0 %v188
    %266 = vmatpush.bf16.msra.mxu0 %v186
    %267 = vmatmul.bf16.gmra.mxu0 %v105
    %v268 = vpop.f32.mrf.mxu0
    %v269 = vadd.f32 %v53, %v268
    %v270 = vpop.f32.mrf.mxu0
    %v271 = vadd.f32 %v53, %v270
    %272 = vmatmul.bf16.gmra.mxu0 %v107
    %v273 = vpop.f32.mrf.mxu0
    %v274 = vadd.f32 %v53, %v273
    %v275 = vpop.f32.mrf.mxu0
    %v276 = vadd.f32 %v53, %v275
    %277 = vmatmul.bf16.gmra.mxu0 %v109
    %v278 = vpop.f32.mrf.mxu0
    %v279 = vadd.f32 %v53, %v278
    %v280 = vpop.f32.mrf.mxu0
    %v281 = vadd.f32 %v53, %v280
    %282 = vmatmul.bf16.gmra.mxu0 %v111
    %v283 = vpop.f32.mrf.mxu0
    %v284 = vadd.f32 %v53, %v283
    %v285 = vpop.f32.mrf.mxu0
    %v286 = vadd.f32 %v53, %v285
    %287 = vmatmul.bf16.gmra.mxu0 %v113
    %v288 = vpop.f32.mrf.mxu0
    %v289 = vadd.f32 %v53, %v288
    %v290 = vpop.f32.mrf.mxu0
    %v291 = vadd.f32 %v53, %v290
    %292 = vmatmul.bf16.gmra.mxu0 %v115
    %v293 = vpop.f32.mrf.mxu0
    %v294 = vadd.f32 %v53, %v293
    %v295 = vpop.f32.mrf.mxu0
    %v296 = vadd.f32 %v53, %v295
    %297 = vmatmul.bf16.gmra.mxu0 %v117
    %v298 = vpop.f32.mrf.mxu0
    %v299 = vadd.f32 %v53, %v298
    %v300 = vpop.f32.mrf.mxu0
    %v301 = vadd.f32 %v53, %v300
    %302 = vmatmul.bf16.gmra.mxu0 %v119
    %v303 = vpop.f32.mrf.mxu0
    %v304 = vadd.f32 %v53, %v303
    %v305 = vpop.f32.mrf.mxu0
    %v306 = vadd.f32 %v53, %v305
    %307 = vdwg.mxu0
    %308 = vmatpush.bf16.msra.mxu0 0
    %309 = vmatpush.bf16.msra.mxu0 0
    %310 = vmatpush.bf16.msra.mxu0 0
    %311 = vmatpush.bf16.msra.mxu0 0
    %312 = vmatpush.bf16.msra.mxu0 0
    %313 = vmatpush.bf16.msra.mxu0 0
    %314 = vmatpush.bf16.msra.mxu0 %v254
    %315 = vmatpush.bf16.msra.mxu0 %v202
    %316 = vmatmul.bf16.gmra.mxu0 %v226
    %v317 = vpop.f32.mrf.mxu0
    %v318 = vadd.f32 %v269, %v317
    %v319 = vpop.f32.mrf.mxu0
    %v320 = vadd.f32 %v271, %v319
    %321 = vmatmul.bf16.gmra.mxu0 %v229
    %v322 = vpop.f32.mrf.mxu0
    %v323 = vadd.f32 %v274, %v322
    %v324 = vpop.f32.mrf.mxu0
    %v325 = vadd.f32 %v276, %v324
    %326 = vmatmul.bf16.gmra.mxu0 %v232
    %v327 = vpop.f32.mrf.mxu0
    %v328 = vadd.f32 %v279, %v327
    %v329 = vpop.f32.mrf.mxu0
    %v330 = vadd.f32 %v281, %v329
    %331 = vmatmul.bf16.gmra.mxu0 %v235
    %v332 = vpop.f32.mrf.mxu0
    %v333 = vadd.f32 %v284, %v332
    %v334 = vpop.f32.mrf.mxu0
    %v335 = vadd.f32 %v286, %v334
    %336 = vmatmul.bf16.gmra.mxu0 %v238
    %v337 = vpop.f32.mrf.mxu0
    %v338 = vadd.f32 %v289, %v337
    %v339 = vpop.f32.mrf.mxu0
    %v340 = vadd.f32 %v291, %v339
    %341 = vmatmul.bf16.gmra.mxu0 %v241
    %v342 = vpop.f32.mrf.mxu0
    %v343 = vadd.f32 %v294, %v342
    %v344 = vpop.f32.mrf.mxu0
    %v345 = vadd.f32 %v296, %v344
    %346 = vmatmul.bf16.gmra.mxu0 %v244
    %v347 = vpop.f32.mrf.mxu0
    %v348 = vadd.f32 %v299, %v347
    %v349 = vpop.f32.mrf.mxu0
    %v350 = vadd.f32 %v301, %v349
    %351 = vmatmul.bf16.gmra.mxu0 %v247
    %v352 = vpop.f32.mrf.mxu0
    %v353 = vadd.f32 %v304, %v352
    %v354 = vpop.f32.mrf.mxu0
    %v355 = vadd.f32 %v306, %v354
    %356 = vdwg.mxu0
    %357 = vmatpush.bf16.msra.mxu0 %v201
    %358 = vmatpush.bf16.msra.mxu0 %v199
    %359 = vmatpush.bf16.msra.mxu0 %v197
    %360 = vmatpush.bf16.msra.mxu0 %v195
    %361 = vmatpush.bf16.msra.mxu0 %v193
    %362 = vmatpush.bf16.msra.mxu0 %v191
    %363 = vmatpush.bf16.msra.mxu0 %v189
    %364 = vmatpush.bf16.msra.mxu0 %v187
    %365 = vmatmul.bf16.gmra.mxu0 %v105
    %v366 = vpop.f32.mrf.mxu0
    %v367 = vadd.f32 %v54, %v366
    %v368 = vpop.f32.mrf.mxu0
    %v369 = vadd.f32 %v54, %v368
    %370 = vmatmul.bf16.gmra.mxu0 %v107
    %v371 = vpop.f32.mrf.mxu0
    %v372 = vadd.f32 %v54, %v371
    %v373 = vpop.f32.mrf.mxu0
    %v374 = vadd.f32 %v54, %v373
    %375 = vmatmul.bf16.gmra.mxu0 %v109
    %v376 = vpop.f32.mrf.mxu0
    %v377 = vadd.f32 %v54, %v376
    %v378 = vpop.f32.mrf.mxu0
    %v379 = vadd.f32 %v54, %v378
    %380 = vmatmul.bf16.gmra.mxu0 %v111
    %v381 = vpop.f32.mrf.mxu0
    %v382 = vadd.f32 %v54, %v381
    %v383 = vpop.f32.mrf.mxu0
    %v384 = vadd.f32 %v54, %v383
    %385 = vmatmul.bf16.gmra.mxu0 %v113
    %v386 = vpop.f32.mrf.mxu0
    %v387 = vadd.f32 %v54, %v386
    %v388 = vpop.f32.mrf.mxu0
    %v389 = vadd.f32 %v54, %v388
    %390 = vmatmul.bf16.gmra.mxu0 %v115
    %v391 = vpop.f32.mrf.mxu0
    %v392 = vadd.f32 %v54, %v391
    %v393 = vpop.f32.mrf.mxu0
    %v394 = vadd.f32 %v54, %v393
    %395 = vmatmul.bf16.gmra.mxu0 %v117
    %v396 = vpop.f32.mrf.mxu0
    %v397 = vadd.f32 %v54, %v396
    %v398 = vpop.f32.mrf.mxu0
    %v399 = vadd.f32 %v54, %v398
    %400 = vmatmul.bf16.gmra.mxu0 %v119
    %v401 = vpop.f32.mrf.mxu0
    %v402 = vadd.f32 %v54, %v401
    %v403 = vpop.f32.mrf.mxu0
    %v404 = vadd.f32 %v54, %v403
    %405 = vdwg.mxu0
    %406 = vmatpush.bf16.msra.mxu0 0
    %407 = vmatpush.bf16.msra.mxu0 0
    %408 = vmatpush.bf16.msra.mxu0 0
    %409 = vmatpush.bf16.msra.mxu0 0
    %410 = vmatpush.bf16.msra.mxu0 0
    %411 = vmatpush.bf16.msra.mxu0 0
    %412 = vmatpush.bf16.msra.mxu0 %v257
    %413 = vmatpush.bf16.msra.mxu0 %v203
    %414 = vmatmul.bf16.gmra.mxu0 %v226
    %v415 = vpop.f32.mrf.mxu0
    %v416 = vadd.f32 %v367, %v415
    %v417 = vpop.f32.mrf.mxu0
    %v418 = vadd.f32 %v369, %v417
    %419 = vmatmul.bf16.gmra.mxu0 %v229
    %v420 = vpop.f32.mrf.mxu0
    %v421 = vadd.f32 %v372, %v420
    %v422 = vpop.f32.mrf.mxu0
    %v423 = vadd.f32 %v374, %v422
    %424 = vmatmul.bf16.gmra.mxu0 %v232
    %v425 = vpop.f32.mrf.mxu0
    %v426 = vadd.f32 %v377, %v425
    %v427 = vpop.f32.mrf.mxu0
    %v428 = vadd.f32 %v379, %v427
    %429 = vmatmul.bf16.gmra.mxu0 %v235
    %v430 = vpop.f32.mrf.mxu0
    %v431 = vadd.f32 %v382, %v430
    %v432 = vpop.f32.mrf.mxu0
    %v433 = vadd.f32 %v384, %v432
    %434 = vmatmul.bf16.gmra.mxu0 %v238
    %v435 = vpop.f32.mrf.mxu0
    %v436 = vadd.f32 %v387, %v435
    %v437 = vpop.f32.mrf.mxu0
    %v438 = vadd.f32 %v389, %v437
    %439 = vmatmul.bf16.gmra.mxu0 %v241
    %v440 = vpop.f32.mrf.mxu0
    %v441 = vadd.f32 %v392, %v440
    %v442 = vpop.f32.mrf.mxu0
    %v443 = vadd.f32 %v394, %v442
    %444 = vmatmul.bf16.gmra.mxu0 %v244
    %v445 = vpop.f32.mrf.mxu0
    %v446 = vadd.f32 %v397, %v445
    %v447 = vpop.f32.mrf.mxu0
    %v448 = vadd.f32 %v399, %v447
    %449 = vmatmul.bf16.gmra.mxu0 %v247
    %v450 = vpop.f32.mrf.mxu0
    %v451 = vadd.f32 %v402, %v450
    %v452 = vpop.f32.mrf.mxu0
    %v453 = vadd.f32 %v404, %v452
    %454 = vdwg.mxu0
    %v455 = vpack.c.bf16 %v416, %v318
    %v456 = vpack.c.bf16 %v418, %v320
    %v457 = vpack.c.bf16 %v421, %v323
    %v458 = vpack.c.bf16 %v423, %v325
    %v459 = vpack.c.bf16 %v426, %v328
    %v460 = vpack.c.bf16 %v428, %v330
    %v461 = vpack.c.bf16 %v431, %v333
    %v462 = vpack.c.bf16 %v433, %v335
    %v463 = vpack.c.bf16 %v436, %v338
    %v464 = vpack.c.bf16 %v438, %v340
    %v465 = vpack.c.bf16 %v441, %v343
    %v466 = vpack.c.bf16 %v443, %v345
    %v467 = vpack.c.bf16 %v446, %v348
    %v468 = vpack.c.bf16 %v448, %v350
    %v469 = vpack.c.bf16 %v451, %v353
    %v470 = vpack.c.bf16 %v453, %v355
    %vm471 = vcmask 1043456
    %vm472 = vcmask 523268
    %vm473 = vmor %vm472, %vm471
    %474 = vst.msk [vmem:[#allocation2] sm:$0xff] %vm473, %v455
    %475 = vst.msk [vmem:[#allocation2 + $0x8] sm:$0xff] %vm473, %v456
    %476 = vst.msk [vmem:[#allocation2 + $0x10] sm:$0xff] %vm473, %v457
    %477 = vst.msk [vmem:[#allocation2 + $0x18] sm:$0xff] %vm473, %v458
    %478 = vst.msk [vmem:[#allocation2 + $0x20] sm:$0xff] %vm473, %v459
    %479 = vst.msk [vmem:[#allocation2 + $0x28] sm:$0xff] %vm473, %v460
    %480 = vst.msk [vmem:[#allocation2 + $0x30] sm:$0xff] %vm473, %v461
    %481 = vst.msk [vmem:[#allocation2 + $0x38] sm:$0xff] %vm473, %v462
    %482 = vst.msk [vmem:[#allocation2 + $0x40] sm:$0xff] %vm473, %v463
    %483 = vst.msk [vmem:[#allocation2 + $0x48] sm:$0xff] %vm473, %v464
    %484 = vst.msk [vmem:[#allocation2 + $0x50] sm:$0xff] %vm473, %v465
    %485 = vst.msk [vmem:[#allocation2 + $0x58] sm:$0xff] %vm473, %v466
    %486 = vst.msk [vmem:[#allocation2 + $0x60] sm:$0xff] %vm473, %v467
    %487 = vst.msk [vmem:[#allocation2 + $0x68] sm:$0xff] %vm473, %v468
    %488 = vst.msk [vmem:[#allocation2 + $0x70] sm:$0xff] %vm473, %v469
    %489 = vst.msk [vmem:[#allocation2 + $0x78] sm:$0xff] %vm473, %v470
    // Predicated region
    $region14: #{yolo_forward.1} parent=1 // pred_check
      _
    $region15: #{yolo_forward.1} parent=1 // pred_check_branch
      %491 = sbr.rel (0) target = $region17
    $region16: #{yolo_forward.1} parent=1 // pred_region
      %493 = vsyncadd [#allocation3], 0
      %s494 = sshll.u32 [#allocation2], 4
      %s495 = int_to_ptr.vmem [resolvable:$true] %s494
      %s496 = sshll.u32 %s3, 4
      %s497 = int_to_ptr.hbm [resolvable:$true] %s496
      %502 = dma.vmem_to_hbm [thread:$0]  %s495, 2048, %s497, [#allocation3], 128, 128, 8
    $region17: #{yolo_forward.1} parent=1 // pred_fallthru
      _
    // Predicated region
    $region18: #{yolo_forward.1} parent=1 // pred_check
      _
    $region19: #{yolo_forward.1} parent=1 // pred_check_branch
      %504 = sbr.rel (0) target = $region21
    $region20: #{yolo_forward.1} parent=1 // pred_region
      %506 = dma.done [#allocation3], 2048
    $region21: #{yolo_forward.1} parent=1 // pred_fallthru
      _
    %507 = vsyncpa [#allocation3], 1

</llo_original>
